<compile_context>
chip_gen: v6e
topology: v6e:2x2x1
jax: 0.10.0
libtpu: 0.0.40
codegen_flags: <defaults>
</compile_context>

<pallas_src>
import math
from functools import partial

import jax
import jax.numpy as jnp
from jax.experimental import pallas as pl
from jax.experimental.pallas import tpu as pltpu

EMBED_DIM = 384      # dinov2_s embedding size
PATCH = 14           # dinov2 patch size
NUM_CLASSES = 4

LANE = 128
SUBLANE = 8
MAX_TILE_B = 2048    # largest batch tile: (2048x640 bf16 in + 2048x128 bf16 out)
                     # double-buffered + resident weight ≈ 6 MiB VMEM.


def _round_up(x, m):
    return (x + m - 1) // m * m


def _head_gemm_kernel(pooled_ref, w_ref, b_ref, out_ref):
    # pooled_ref : (TILE_B, Kp)  bf16   mean-pooled patch features (zero-padded K)
    # w_ref      : (Kp, Cp)      bf16   fused (backbone-proj @ head) weight, VMEM-resident
    # b_ref      : (1, Cp)       f32    head bias (zero-padded), VMEM-resident
    # out_ref    : (TILE_B, Cp)  bf16   lane-dense logits block
    acc = jnp.dot(pooled_ref[...], w_ref[...],
                  preferred_element_type=jnp.float32)     # f32 accumulate on MXU
    out_ref[...] = (acc + b_ref[...]).astype(out_ref.dtype)


def _batch_tiling(batch):
    """Pick (tile_b, num_tiles): minimal sublane padding, tiles up to
    MAX_TILE_B, and >= 2 grid steps once B >= 16 so the 'parallel' grid axis
    actually uses both TensorCores on v7x (no effect on v5e/v6e)."""
    b8 = _round_up(batch, SUBLANE)
    if b8 < 2 * SUBLANE:
        return b8, 1
    num_tiles = max(2, pl.cdiv(b8, MAX_TILE_B))
    tile_b = _round_up(pl.cdiv(b8, num_tiles), SUBLANE)
    return tile_b, num_tiles


def prepare_localiser_params(w_embed, w_head, b_head):
    """One-time frozen-weight prep (hoisted out of the per-call forward path):
    fuse the stand-in backbone projection with the head, cast to bf16 and
    zero-pad to MXU/lane-friendly shapes."""
    patch_dim = w_embed.shape[0]
    num_classes = w_head.shape[1]
    kp = _round_up(patch_dim, LANE)                       # 588 -> 640
    cp = _round_up(max(num_classes, LANE), LANE)          # 4   -> 128 (do NOT pad to 256)
    w_fused = (w_embed @ w_head).astype(jnp.bfloat16)     # f32 fuse, single bf16 cast
    w_p = jnp.zeros((kp, cp), jnp.bfloat16).at[:patch_dim, :num_classes].set(w_fused)
    b_p = jnp.zeros((1, cp), jnp.float32).at[0, :num_classes].set(
        b_head.astype(jnp.float32))
    return w_p, b_p, num_classes


@partial(jax.jit, static_argnames=("num_classes",))
def localiser_forward(x_nchw, w_p, b_p, *, num_classes):
    """x_nchw: (B, 3, H, W) with H, W multiples of PATCH. Returns (B, num_classes)."""
    B, C_in, H, W = x_nchw.shape
    assert H % PATCH == 0 and W % PATCH == 0
    ph, pw = H // PATCH, W // PATCH
    patch_dim = C_in * PATCH * PATCH                      # 588 for RGB
    Kp, Cp = w_p.shape
    assert Kp >= patch_dim and Cp >= num_classes

    # 1) Patch mean-pool (exact: pooling commutes with the fused linear weight).
    #    Single fused XLA pass over the image: reshape -> f32 reduce -> scale ->
    #    bf16 cast; no intermediate copies.
    # TODO(synk): pooling is not fused into the Pallas kernel — W=224 is not a
    # multiple of 128, so the period-14 reduction has no relayout-free Mosaic
    # form; the image is read from HBM exactly once here regardless.
    scale = 1.0 / (ph * pw)
    pooled = (x_nchw.astype(jnp.float32)
              .reshape(B, C_in, ph, PATCH, pw, PATCH)
              .sum(axis=(2, 4)) * scale)                  # (B, 3, 14, 14) f32
    pooled = pooled.reshape(B, patch_dim).astype(jnp.bfloat16)   # (B, 588) bf16

    # 2) Minimal padding: batch to tile multiple (waste bounded by a few
    #    sublane rows), K to 640 so loads are lane-dense.  One cheap pad op.
    tile_b, num_tiles = _batch_tiling(B)
    b_pad = tile_b * num_tiles
    pooled_p = jnp.pad(pooled, ((0, b_pad - B), (0, Kp - patch_dim)))

    out = pl.pallas_call(
        _head_gemm_kernel,
        out_shape=jax.ShapeDtypeStruct((b_pad, Cp), jnp.bfloat16),
        grid=(num_tiles,),
        in_specs=[
            pl.BlockSpec((tile_b, Kp), lambda i: (i, 0)),   # batch tile of pooled feats
            pl.BlockSpec((Kp, Cp), lambda i: (0, 0)),       # fused weight: VMEM-resident
            pl.BlockSpec((1, Cp), lambda i: (0, 0)),        # bias: VMEM-resident
        ],
        out_specs=pl.BlockSpec((tile_b, Cp), lambda i: (i, 0)),
        compiler_params=pltpu.CompilerParams(
            dimension_semantics=("parallel",)),             # megacore split on v7x
    )(pooled_p, w_p, b_p)

    return out[:B, :num_classes]


def init_params(key, num_classes=NUM_CLASSES):
    """Deterministic parameter init (nn.Linear-style uniform for the head)."""
    k1, k2, k3 = jax.random.split(key, 3)
    patch_dim = 3 * PATCH * PATCH
    # frozen stand-in backbone projection
    w_embed = jax.random.normal(k1, (patch_dim, EMBED_DIM), jnp.float32) / math.sqrt(patch_dim)
    # head: nn.Linear(EMBED_DIM, num_classes) -> weight stored transposed (E, C), bias (C,)
    bound = 1.0 / math.sqrt(EMBED_DIM)
    w_head_t = jax.random.uniform(k2, (EMBED_DIM, num_classes), jnp.float32,
                                  minval=-bound, maxval=bound)
    b_head = jax.random.uniform(k3, (num_classes,), jnp.float32,
                                minval=-bound, maxval=bound)
    return w_embed, w_head_t, b_head


def _reference_logits(x, w_embed, w_head, b_head):
    B, C_in, H, W = x.shape
    ph, pw = H // PATCH, W // PATCH
    patch_dim = C_in * PATCH * PATCH
    pooled = x.reshape(B, C_in, ph, PATCH, pw, PATCH).mean(axis=(2, 4))
    pooled = pooled.reshape(B, patch_dim)
    w_fused = w_embed @ w_head
    ref_bf16 = jnp.dot(pooled.astype(jnp.bfloat16), w_fused.astype(jnp.bfloat16),
                       preferred_element_type=jnp.float32) + b_head
    ref_f32 = pooled @ w_fused + b_head
    return ref_bf16, ref_f32


if __name__ == "__main__":
    key = jax.random.PRNGKey(0)
    kx, kp = jax.random.split(key)

    # small image consistent with patch size 14: (B=2, C=3, H=28, W=28)
    x = jax.random.normal(kx, (2, 3, 28, 28), jnp.float32)
    w_embed, w_head, b_head = init_params(kp, NUM_CLASSES)

    # One-time frozen-weight prep, hoisted out of the forward path.
    w_p, b_p, num_classes = prepare_localiser_params(w_embed, w_head, b_head)

    out = localiser_forward(x, w_p, b_p, num_classes=num_classes)
    out = jax.block_until_ready(out).astype(jnp.float32)
    assert out.shape == (2, NUM_CLASSES)

    ref_bf16, ref_f32 = _reference_logits(x, w_embed, w_head, b_head)
    assert jnp.allclose(out, ref_bf16, atol=1.5e-2, rtol=1.5e-2), (out, ref_bf16)
    assert jnp.allclose(out, ref_f32, atol=5e-2, rtol=5e-2), (out, ref_f32)

    # Second small run exercising the multi-tile grid (>=2 steps) + ragged
    # batch padding path.
    x2 = jax.random.normal(jax.random.PRNGKey(1), (20, 3, 28, 28), jnp.float32)
    out2 = localiser_forward(x2, w_p, b_p, num_classes=num_classes)
    out2 = jax.block_until_ready(out2).astype(jnp.float32)
    assert out2.shape == (20, NUM_CLASSES)
    _, ref2_f32 = _reference_logits(x2, w_embed, w_head, b_head)
    assert jnp.allclose(out2, ref2_f32, atol=5e-2, rtol=5e-2)

    print("KERNEL_OK")
</pallas_src>

<mosaic_0001>
module attributes {stable_mosaic.version = 11 : i64} {
  func.func @_head_gemm_kernel(%arg0: i32, %arg1: memref<8x640xbf16, #tpu.memory_space<vmem>>, %arg2: memref<640x128xbf16, #tpu.memory_space<vmem>>, %arg3: memref<1x128xf32, #tpu.memory_space<vmem>>, %arg4: memref<8x128xbf16, #tpu.memory_space<vmem>>) attributes {dimension_semantics = [#tpu.dimension_semantics<parallel>], iteration_bounds = array<i64: 1>, scalar_prefetch = 0 : i64, scratch_operands = 0 : i64, tpu.core_type = #tpu.core_type<tc>, window_params = [{transform_indices = @transform_0, window_bounds = array<i64: 8, 640>}, {pipeline_mode = #tpu.pipeline_mode<synchronous>, transform_indices = @transform_1, window_bounds = array<i64: 640, 128>}, {pipeline_mode = #tpu.pipeline_mode<synchronous>, transform_indices = @transform_2, window_bounds = array<i64: 1, 128>}, {transform_indices = @transform_3, window_bounds = array<i64: 8, 128>}]} {
    %c0 = arith.constant 0 : index
    %c0_0 = arith.constant 0 : index
    %0 = vector.load %arg1[%c0, %c0_0] : memref<8x640xbf16, #tpu.memory_space<vmem>>, vector<8x640xbf16>
    %c0_1 = arith.constant 0 : index
    %c0_2 = arith.constant 0 : index
    %1 = vector.load %arg2[%c0_1, %c0_2] : memref<640x128xbf16, #tpu.memory_space<vmem>>, vector<640x128xbf16>
    %cst = arith.constant dense<0.000000e+00> : vector<8x128xf32>
    %2 = tpu.matmul %0, %1, %cst {dimension_numbers = #tpu.dot_dimension_numbers<[1], [0], [0], [1], [0, 0, 1, 1], [], []>} : vector<8x640xbf16>, vector<640x128xbf16>, vector<8x128xf32> -> vector<8x128xf32>
    %c0_3 = arith.constant 0 : index
    %c0_4 = arith.constant 0 : index
    %3 = vector.load %arg3[%c0_3, %c0_4] : memref<1x128xf32, #tpu.memory_space<vmem>>, vector<1x128xf32>
    %4 = vector.broadcast %3 : vector<1x128xf32> to vector<8x128xf32>
    %5 = arith.addf %2, %4 : vector<8x128xf32>
    %6 = arith.truncf %5 : vector<8x128xf32> to vector<8x128xbf16>
    %c0_5 = arith.constant 0 : index
    %c0_6 = arith.constant 0 : index
    %7 = vector.load %arg4[%c0_5, %c0_6] : memref<8x128xbf16, #tpu.memory_space<vmem>>, vector<8x128xbf16>
    tpu.vector_store %arg4[%c0_5, %c0_6], %6 {strides = array<i32>} : memref<8x128xbf16, #tpu.memory_space<vmem>>, vector<8x128xbf16>,
    return
  }
  func.func @transform_0(%arg0: i32) -> (i32, i32) {
    %c0_i32 = arith.constant 0 : i32
    %c0_i32_0 = arith.constant 0 : i32
    return %arg0, %c0_i32 : i32, i32
  }
  func.func @transform_1(%arg0: i32) -> (i32, i32) {
    %c0_i32 = arith.constant 0 : i32
    %c0_i32_0 = arith.constant 0 : i32
    %c0_i32_1 = arith.constant 0 : i32
    return %c0_i32, %c0_i32_0 : i32, i32
  }
  func.func @transform_2(%arg0: i32) -> (i32, i32) {
    %c0_i32 = arith.constant 0 : i32
    %c0_i32_0 = arith.constant 0 : i32
    %c0_i32_1 = arith.constant 0 : i32
    return %c0_i32, %c0_i32_0 : i32, i32
  }
  func.func @transform_3(%arg0: i32) -> (i32, i32) {
    %c0_i32 = arith.constant 0 : i32
    %c0_i32_0 = arith.constant 0 : i32
    return %arg0, %c0_i32 : i32, i32
  }
}

</mosaic_0001>

<llo_original>
// kernel: localiser_forward.1
$region0: #{localiser_forward.1}
  #allocation0 [shape = 'u32[]', space=smem, size = 0x4, offset = 0x4, fixed_abs, tag = 'smem constant byte address 0x4 - core index']
  #allocation1 [shape = 'u32[144,128]{1,0:T(1,128)}', space=vmem, size = 0x12000, scoped, tag = 'internal scratch']
  %s0 = inlined_call_operand.vmem [shape: bf16[8,640], index: 0, kind: input, shape index: {}]
  %s1 = inlined_call_operand.vmem [shape: bf16[640,128], index: 1, kind: input, shape index: {}]
  %s2 = inlined_call_operand.vmem [shape: f32[1,128], index: 2, kind: input, shape index: {}]
  %s3 = inlined_call_operand.vmem [shape: bf16[8,128], index: 3, kind: output, shape index: {}]
  %s4 = sld [smem:[#allocation0]]
  $region22: #{localiser_forward.1} parent=0
    _
  %s6 = ssub.s32 1, %s4
  %s7 = scalar_select 0, %s6, %s4
  // Predicated region
  $region2: #{localiser_forward.1} parent=0 // pred_check
    _
  $region3: #{localiser_forward.1} parent=0 // pred_check_branch
    %9 = sbr.rel (0) target = $region5
  $region4: #{localiser_forward.1} parent=0 // pred_region
    _
  $region5: #{localiser_forward.1} parent=0 // pred_fallthru
    _
  // Predicated region
  $region6: #{localiser_forward.1} parent=0 // pred_check
    _
  $region7: #{localiser_forward.1} parent=0 // pred_check_branch
    %11 = sbr.rel (0) target = $region9
  $region8: #{localiser_forward.1} parent=0 // pred_region
    _
  $region9: #{localiser_forward.1} parent=0 // pred_fallthru
    _
  // Predicated region
  $region10: #{localiser_forward.1} parent=0 // pred_check
    _
  $region11: #{localiser_forward.1} parent=0 // pred_check_branch
    %13 = sbr.rel (0) target = $region13
  $region12: #{localiser_forward.1} parent=0 // pred_region
    _
  $region13: #{localiser_forward.1} parent=0 // pred_fallthru
    _
  %v15 = vld [vmem:[%s0] sm:$0xff]
  %v16 = vld [vmem:[%s0 + $0x8] sm:$0xff]
  %v17 = vld [vmem:[%s0 + $0x10] sm:$0xf]
  %v18 = vld [vmem:[%s1] sm:$0xf]
  %v19 = vld [vmem:[%s1 + $0x4] sm:$0xf]
  %v20 = vld [vmem:[%s1 + $0x8] sm:$0xf]
  %v21 = vld [vmem:[%s1 + $0xc] sm:$0xf]
  %v22 = vld [vmem:[%s1 + $0x10] sm:$0xf]
  %v23 = vld [vmem:[%s1 + $0x14] sm:$0xf]
  %v24 = vld [vmem:[%s1 + $0x18] sm:$0xf]
  %v25 = vld [vmem:[%s1 + $0x1c] sm:$0xf]
  %v26 = vld [vmem:[%s1 + $0x20] sm:$0xf]
  %v27 = vld [vmem:[%s1 + $0x24] sm:$0xf]
  %v28 = vld [vmem:[%s1 + $0x28] sm:$0xf]
  %v29 = vld [vmem:[%s1 + $0x2c] sm:$0xf]
  %v30 = vld [vmem:[%s1 + $0x30] sm:$0xf]
  %v31 = vld [vmem:[%s1 + $0x34] sm:$0xf]
  %v32 = vld [vmem:[%s1 + $0x38] sm:$0xf]
  %v33 = vld [vmem:[%s1 + $0x3c] sm:$0xf]
  %v34 = vld [vmem:[%s1 + $0x40] sm:$0xf]
  %v35 = vld [vmem:[%s1 + $0x44] sm:$0xf]
  %v36 = vld [vmem:[%s1 + $0x48] sm:$0xf]
  %v37 = vld [vmem:[%s1 + $0x4c] sm:$0xf]
  %v38 = vld [vmem:[%s1 + $0x50] sm:$0xf]
  %v39 = vld [vmem:[%s1 + $0x54] sm:$0xf]
  %v40 = vld [vmem:[%s1 + $0x58] sm:$0xf]
  %v41 = vld [vmem:[%s1 + $0x5c] sm:$0xf]
  %v42 = vld [vmem:[%s1 + $0x60] sm:$0xf]
  %v43 = vld [vmem:[%s1 + $0x64] sm:$0xf]
  %v44 = vld [vmem:[%s1 + $0x68] sm:$0xf]
  %v45 = vld [vmem:[%s1 + $0x6c] sm:$0xf]
  %v46 = vld [vmem:[%s1 + $0x70] sm:$0xf]
  %v47 = vld [vmem:[%s1 + $0x74] sm:$0xf]
  %v48 = vld [vmem:[%s1 + $0x78] sm:$0xf]
  %v49 = vld [vmem:[%s1 + $0x7c] sm:$0xf]
  %v50 = vld [vmem:[%s1 + $0x80] sm:$0xf]
  %v51 = vld [vmem:[%s1 + $0x84] sm:$0xf]
  %v52 = vld [vmem:[%s1 + $0x88] sm:$0xf]
  %v53 = vld [vmem:[%s1 + $0x8c] sm:$0xf]
  %v54 = vld [vmem:[%s1 + $0x90] sm:$0xf]
  %v55 = vld [vmem:[%s1 + $0x94] sm:$0xf]
  %v56 = vld [vmem:[%s1 + $0x98] sm:$0xf]
  %v57 = vld [vmem:[%s1 + $0x9c] sm:$0xf]
  %v58 = vld [vmem:[%s1 + $0xa0] sm:$0xf]
  %v59 = vld [vmem:[%s1 + $0xa4] sm:$0xf]
  %v60 = vld [vmem:[%s1 + $0xa8] sm:$0xf]
  %v61 = vld [vmem:[%s1 + $0xac] sm:$0xf]
  %v62 = vld [vmem:[%s1 + $0xb0] sm:$0xf]
  %v63 = vld [vmem:[%s1 + $0xb4] sm:$0xf]
  %v64 = vld [vmem:[%s1 + $0xb8] sm:$0xf]
  %v65 = vld [vmem:[%s1 + $0xbc] sm:$0xf]
  %v66 = vld [vmem:[%s1 + $0xc0] sm:$0xf]
  %v67 = vld [vmem:[%s1 + $0xc4] sm:$0xf]
  %v68 = vld [vmem:[%s1 + $0xc8] sm:$0xf]
  %v69 = vld [vmem:[%s1 + $0xcc] sm:$0xf]
  %v70 = vld [vmem:[%s1 + $0xd0] sm:$0xf]
  %v71 = vld [vmem:[%s1 + $0xd4] sm:$0xf]
  %v72 = vld [vmem:[%s1 + $0xd8] sm:$0xf]
  %v73 = vld [vmem:[%s1 + $0xdc] sm:$0xf]
  %v74 = vld [vmem:[%s1 + $0xe0] sm:$0xf]
  %v75 = vld [vmem:[%s1 + $0xe4] sm:$0xf]
  %v76 = vld [vmem:[%s1 + $0xe8] sm:$0xf]
  %v77 = vld [vmem:[%s1 + $0xec] sm:$0xf]
  %v78 = vld [vmem:[%s1 + $0xf0] sm:$0xf]
  %v79 = vld [vmem:[%s1 + $0xf4] sm:$0xf]
  %v80 = vld [vmem:[%s1 + $0xf8] sm:$0xf]
  %v81 = vld [vmem:[%s1 + $0xfc] sm:$0xf]
  %v82 = vld [vmem:[%s1 + $0x100] sm:$0xf]
  %v83 = vld [vmem:[%s1 + $0x104] sm:$0xf]
  %v84 = vld [vmem:[%s1 + $0x108] sm:$0xf]
  %v85 = vld [vmem:[%s1 + $0x10c] sm:$0xf]
  %v86 = vld [vmem:[%s1 + $0x110] sm:$0xf]
  %v87 = vld [vmem:[%s1 + $0x114] sm:$0xf]
  %v88 = vld [vmem:[%s1 + $0x118] sm:$0xf]
  %v89 = vld [vmem:[%s1 + $0x11c] sm:$0xf]
  %v90 = vld [vmem:[%s1 + $0x120] sm:$0xf]
  %v91 = vld [vmem:[%s1 + $0x124] sm:$0xf]
  %v92 = vld [vmem:[%s1 + $0x128] sm:$0xf]
  %v93 = vld [vmem:[%s1 + $0x12c] sm:$0xf]
  %v94 = vld [vmem:[%s1 + $0x130] sm:$0xf]
  %v95 = vld [vmem:[%s1 + $0x134] sm:$0xf]
  %v96 = vld [vmem:[%s1 + $0x138] sm:$0xf]
  %v97 = vld [vmem:[%s1 + $0x13c] sm:$0xf]
  %v98 = vld [vmem:[%s2] sm:$0x1]
  %v100 = vlaneseq
  %v101 = vshrl.u32 %v100, 7
  %v102 = vsub.s32 0, %v101
  %v103 = vrot.slane %v98, %v102
  %v108 = vunpack.c.l.b16 %v15
  %v109 = vunpack.c.h.b16 %v15
  %v110 = vunpack.c.l.b16 %v16
  %v111 = vunpack.c.h.b16 %v16
  %v112 = vunpack.c.l.b16 %v17
  %v113 = vpack.c.b16 %v108, %v108
  %v114 = vpack.c.b16 %v109, %v109
  %v115 = vpack.c.b16 %v110, %v110
  %v116 = vpack.c.b16 %v111, %v111
  %v117 = vpack.c.b16 %v112, %v112
  %v203 = vunpack.c.l.b16 %v18
  %v204 = vunpack.c.l.b16 %v19
  %v205 = vunpack.c.l.b16 %v20
  %v206 = vunpack.c.l.b16 %v21
  %v207 = vunpack.c.l.b16 %v22
  %v208 = vunpack.c.l.b16 %v23
  %v209 = vunpack.c.l.b16 %v24
  %v210 = vunpack.c.l.b16 %v25
  %v211 = vunpack.c.l.b16 %v26
  %v212 = vunpack.c.l.b16 %v27
  %v213 = vunpack.c.l.b16 %v28
  %v214 = vunpack.c.l.b16 %v29
  %v215 = vunpack.c.l.b16 %v30
  %v216 = vunpack.c.l.b16 %v31
  %v217 = vunpack.c.l.b16 %v32
  %v218 = vunpack.c.l.b16 %v33
  %v219 = vunpack.c.l.b16 %v34
  %v220 = vunpack.c.l.b16 %v35
  %v221 = vunpack.c.l.b16 %v36
  %v222 = vunpack.c.l.b16 %v37
  %v223 = vunpack.c.l.b16 %v38
  %v224 = vunpack.c.l.b16 %v39
  %v225 = vunpack.c.l.b16 %v40
  %v226 = vunpack.c.l.b16 %v41
  %v227 = vunpack.c.l.b16 %v42
  %v228 = vunpack.c.l.b16 %v43
  %v229 = vunpack.c.l.b16 %v44
  %v230 = vunpack.c.l.b16 %v45
  %v231 = vunpack.c.l.b16 %v46
  %v232 = vunpack.c.l.b16 %v47
  %v233 = vunpack.c.l.b16 %v48
  %v234 = vunpack.c.l.b16 %v49
  %v235 = vunpack.c.l.b16 %v50
  %v236 = vunpack.c.l.b16 %v51
  %v237 = vunpack.c.l.b16 %v52
  %v238 = vunpack.c.l.b16 %v53
  %v239 = vunpack.c.l.b16 %v54
  %v240 = vunpack.c.l.b16 %v55
  %v241 = vunpack.c.l.b16 %v56
  %v242 = vunpack.c.l.b16 %v57
  %v243 = vunpack.c.l.b16 %v58
  %v244 = vunpack.c.l.b16 %v59
  %v245 = vunpack.c.l.b16 %v60
  %v246 = vunpack.c.l.b16 %v61
  %v247 = vunpack.c.l.b16 %v62
  %v248 = vunpack.c.l.b16 %v63
  %v249 = vunpack.c.l.b16 %v64
  %v250 = vunpack.c.l.b16 %v65
  %v251 = vunpack.c.l.b16 %v66
  %v252 = vunpack.c.l.b16 %v67
  %v253 = vunpack.c.l.b16 %v68
  %v254 = vunpack.c.l.b16 %v69
  %v255 = vunpack.c.l.b16 %v70
  %v256 = vunpack.c.l.b16 %v71
  %v257 = vunpack.c.l.b16 %v72
  %v258 = vunpack.c.l.b16 %v73
  %v259 = vunpack.c.l.b16 %v74
  %v260 = vunpack.c.l.b16 %v75
  %v261 = vunpack.c.l.b16 %v76
  %v262 = vunpack.c.l.b16 %v77
  %v263 = vunpack.c.l.b16 %v78
  %v264 = vunpack.c.l.b16 %v79
  %v265 = vunpack.c.l.b16 %v80
  %v266 = vunpack.c.l.b16 %v81
  %v267 = vunpack.c.l.b16 %v82
  %v268 = vunpack.c.l.b16 %v83
  %v269 = vunpack.c.l.b16 %v84
  %v270 = vunpack.c.l.b16 %v85
  %v271 = vunpack.c.l.b16 %v86
  %v272 = vunpack.c.l.b16 %v87
  %v273 = vunpack.c.l.b16 %v88
  %v274 = vunpack.c.l.b16 %v89
  %v275 = vunpack.c.l.b16 %v90
  %v276 = vunpack.c.l.b16 %v91
  %v277 = vunpack.c.l.b16 %v92
  %v278 = vunpack.c.l.b16 %v93
  %v279 = vunpack.c.l.b16 %v94
  %v280 = vunpack.c.l.b16 %v95
  %v281 = vunpack.c.l.b16 %v96
  %v282 = vunpack.c.l.b16 %v97
  %v283 = vpack.c.b16 %v204, %v203
  %v284 = vpack.c.b16 %v206, %v205
  %v285 = vpack.c.b16 %v208, %v207
  %v286 = vpack.c.b16 %v210, %v209
  %v287 = vpack.c.b16 %v212, %v211
  %v288 = vpack.c.b16 %v214, %v213
  %v289 = vpack.c.b16 %v216, %v215
  %v290 = vpack.c.b16 %v218, %v217
  %v291 = vpack.c.b16 %v220, %v219
  %v292 = vpack.c.b16 %v222, %v221
  %v293 = vpack.c.b16 %v224, %v223
  %v294 = vpack.c.b16 %v226, %v225
  %v295 = vpack.c.b16 %v228, %v227
  %v296 = vpack.c.b16 %v230, %v229
  %v297 = vpack.c.b16 %v232, %v231
  %v298 = vpack.c.b16 %v234, %v233
  %v299 = vpack.c.b16 %v236, %v235
  %v300 = vpack.c.b16 %v238, %v237
  %v301 = vpack.c.b16 %v240, %v239
  %v302 = vpack.c.b16 %v242, %v241
  %v303 = vpack.c.b16 %v244, %v243
  %v304 = vpack.c.b16 %v246, %v245
  %v305 = vpack.c.b16 %v248, %v247
  %v306 = vpack.c.b16 %v250, %v249
  %v307 = vpack.c.b16 %v252, %v251
  %v308 = vpack.c.b16 %v254, %v253
  %v309 = vpack.c.b16 %v256, %v255
  %v310 = vpack.c.b16 %v258, %v257
  %v311 = vpack.c.b16 %v260, %v259
  %v312 = vpack.c.b16 %v262, %v261
  %v313 = vpack.c.b16 %v264, %v263
  %v314 = vpack.c.b16 %v266, %v265
  %v315 = vpack.c.b16 %v268, %v267
  %v316 = vpack.c.b16 %v270, %v269
  %v317 = vpack.c.b16 %v272, %v271
  %v318 = vpack.c.b16 %v274, %v273
  %v319 = vpack.c.b16 %v276, %v275
  %v320 = vpack.c.b16 %v278, %v277
  %v321 = vpack.c.b16 %v280, %v279
  %v322 = vpack.c.b16 %v282, %v281
  %363 = vmatprep.subr.bf16.mxu0 0
  %364 = vmatpush1.bf16.msra.mxu0 %v290
  %365 = vmatprep.subr.bf16.mxu0 0
  %366 = vmatpush1.bf16.msra.mxu0 %v289
  %367 = vmatprep.subr.bf16.mxu0 0
  %368 = vmatpush1.bf16.msra.mxu0 %v288
  %369 = vmatprep.subr.bf16.mxu0 0
  %370 = vmatpush1.bf16.msra.mxu0 %v287
  %371 = vmatprep.subr.bf16.mxu0 0
  %372 = vmatpush1.bf16.msra.mxu0 %v286
  %373 = vmatprep.subr.bf16.mxu0 0
  %374 = vmatpush1.bf16.msra.mxu0 %v285
  %375 = vmatprep.subr.bf16.mxu0 0
  %376 = vmatpush1.bf16.msra.mxu0 %v284
  %377 = vmatprep.subr.bf16.mxu0 0
  %378 = vmatpush1.bf16.msra.mxu0 %v283
  %379 = vmatprep.subr.bf16.mxu0 0
  %380 = vmatpush2.bf16.msra.mxu0 %v298
  %381 = vmatprep.subr.bf16.mxu0 0
  %382 = vmatpush2.bf16.msra.mxu0 %v297
  %383 = vmatprep.subr.bf16.mxu0 0
  %384 = vmatpush2.bf16.msra.mxu0 %v296
  %385 = vmatprep.subr.bf16.mxu0 0
  %386 = vmatpush2.bf16.msra.mxu0 %v295
  %387 = vmatprep.subr.bf16.mxu0 0
  %388 = vmatpush2.bf16.msra.mxu0 %v294
  %389 = vmatprep.subr.bf16.mxu0 0
  %390 = vmatpush2.bf16.msra.mxu0 %v293
  %391 = vmatprep.subr.bf16.mxu0 0
  %392 = vmatpush2.bf16.msra.mxu0 %v292
  %393 = vmatprep.subr.bf16.mxu0 0
  %394 = vmatpush2.bf16.msra.mxu0 %v291
  %395 = vmatprep.mubr.bf16.mxu0 %v114
  %396 = vmatmul.mubr.bf16.gmra.mxu0 %v113
  %v397 = vpop.f32.mrf.mxu0
  %v398 = vadd.f32 %v103, %v397
  %v399 = vpop.f32.mrf.mxu0
  %v400 = vpop.f32.mrf.mxu0
  %v401 = vpop.f32.mrf.mxu0
  %402 = vdwg.mxu0
  %403 = vmatprep.subr.bf16.mxu0 0
  %404 = vmatpush1.bf16.msra.mxu0 %v306
  %405 = vmatprep.subr.bf16.mxu0 0
  %406 = vmatpush1.bf16.msra.mxu0 %v305
  %407 = vmatprep.subr.bf16.mxu0 0
  %408 = vmatpush1.bf16.msra.mxu0 %v304
  %409 = vmatprep.subr.bf16.mxu0 0
  %410 = vmatpush1.bf16.msra.mxu0 %v303
  %411 = vmatprep.subr.bf16.mxu0 0
  %412 = vmatpush1.bf16.msra.mxu0 %v302
  %413 = vmatprep.subr.bf16.mxu0 0
  %414 = vmatpush1.bf16.msra.mxu0 %v301
  %415 = vmatprep.subr.bf16.mxu0 0
  %416 = vmatpush1.bf16.msra.mxu0 %v300
  %417 = vmatprep.subr.bf16.mxu0 0
  %418 = vmatpush1.bf16.msra.mxu0 %v299
  %419 = vmatprep.subr.bf16.mxu0 0
  %420 = vmatpush2.bf16.msra.mxu0 %v314
  %421 = vmatprep.subr.bf16.mxu0 0
  %422 = vmatpush2.bf16.msra.mxu0 %v313
  %423 = vmatprep.subr.bf16.mxu0 0
  %424 = vmatpush2.bf16.msra.mxu0 %v312
  %425 = vmatprep.subr.bf16.mxu0 0
  %426 = vmatpush2.bf16.msra.mxu0 %v311
  %427 = vmatprep.subr.bf16.mxu0 0
  %428 = vmatpush2.bf16.msra.mxu0 %v310
  %429 = vmatprep.subr.bf16.mxu0 0
  %430 = vmatpush2.bf16.msra.mxu0 %v309
  %431 = vmatprep.subr.bf16.mxu0 0
  %432 = vmatpush2.bf16.msra.mxu0 %v308
  %433 = vmatprep.subr.bf16.mxu0 0
  %434 = vmatpush2.bf16.msra.mxu0 %v307
  %435 = vmatprep.mubr.bf16.mxu0 %v116
  %436 = vmatmul.mubr.bf16.gmra.mxu0 %v115
  %v437 = vpop.f32.mrf.mxu0
  %v438 = vadd.f32 %v398, %v437
  %v439 = vpop.f32.mrf.mxu0
  %v440 = vpop.f32.mrf.mxu0
  %v441 = vpop.f32.mrf.mxu0
  %442 = vdwg.mxu0
  %443 = vmatprep.subr.bf16.mxu0 0
  %444 = vmatpush1.bf16.msra.mxu0 %v322
  %445 = vmatprep.subr.bf16.mxu0 0
  %446 = vmatpush1.bf16.msra.mxu0 %v321
  %447 = vmatprep.subr.bf16.mxu0 0
  %448 = vmatpush1.bf16.msra.mxu0 %v320
  %449 = vmatprep.subr.bf16.mxu0 0
  %450 = vmatpush1.bf16.msra.mxu0 %v319
  %451 = vmatprep.subr.bf16.mxu0 0
  %452 = vmatpush1.bf16.msra.mxu0 %v318
  %453 = vmatprep.subr.bf16.mxu0 0
  %454 = vmatpush1.bf16.msra.mxu0 %v317
  %455 = vmatprep.subr.bf16.mxu0 0
  %456 = vmatpush1.bf16.msra.mxu0 %v316
  %457 = vmatprep.subr.bf16.mxu0 0
  %458 = vmatpush1.bf16.msra.mxu0 %v315
  %459 = vmatprep.subr.bf16.mxu0 0
  %460 = vmatpush2.bf16.msra.mxu0 0
  %461 = vmatprep.subr.bf16.mxu0 0
  %462 = vmatpush2.bf16.msra.mxu0 0
  %463 = vmatprep.subr.bf16.mxu0 0
  %464 = vmatpush2.bf16.msra.mxu0 0
  %465 = vmatprep.subr.bf16.mxu0 0
  %466 = vmatpush2.bf16.msra.mxu0 0
  %467 = vmatprep.subr.bf16.mxu0 0
  %468 = vmatpush2.bf16.msra.mxu0 0
  %469 = vmatprep.subr.bf16.mxu0 0
  %470 = vmatpush2.bf16.msra.mxu0 0
  %471 = vmatprep.subr.bf16.mxu0 0
  %472 = vmatpush2.bf16.msra.mxu0 0
  %473 = vmatprep.subr.bf16.mxu0 0
  %474 = vmatpush2.bf16.msra.mxu0 0
  %475 = vmatprep.mubr.bf16.mxu0 0
  %476 = vmatmul.mubr.bf16.gmra.mxu0 %v117
  %v477 = vpop.f32.mrf.mxu0
  %v478 = vadd.f32 %v438, %v477
  %v479 = vpop.f32.mrf.mxu0
  %v480 = vpop.f32.mrf.mxu0
  %v481 = vpop.f32.mrf.mxu0
  %482 = vdwg.mxu0
  %v483 = vpack.c.bf16 %v478, %v478
  %484 = vst [vmem:[%s3] sm:$0xf] %v483
  // Predicated region
  $region14: #{localiser_forward.1} parent=0 // pred_check
    _
  $region15: #{localiser_forward.1} parent=0 // pred_check_branch
    %486 = sbr.rel (0) target = $region17
  $region16: #{localiser_forward.1} parent=0 // pred_region
    _
  $region17: #{localiser_forward.1} parent=0 // pred_fallthru
    _
  // Predicated region
  $region18: #{localiser_forward.1} parent=0 // pred_check
    _
  $region19: #{localiser_forward.1} parent=0 // pred_check_branch
    %488 = sbr.rel (0) target = $region21
  $region20: #{localiser_forward.1} parent=0 // pred_region
    _
  $region21: #{localiser_forward.1} parent=0 // pred_fallthru
    _

</llo_original>
